<compile_context>
chip_gen: v6e
topology: v6e:2x2x1
jax: 0.10.0
libtpu: 0.0.40
codegen_flags: <defaults>
</compile_context>

<pallas_src>
import functools

import jax
import jax.numpy as jnp
from jax.experimental import pallas as pl
from jax.experimental.pallas import tpu as pltpu


def _round_up(x, m):
    return (x + m - 1) // m * m


def _conv_kernel(x_ref, w_ref, o_ref, x_scr, *, stride, ksize, pad):
    # x_ref : (1, H, W, Cin)         one batch element, unpadded
    # w_ref : (K*K*Cin, Cout_pad)    fused im2col weight, bf16, lane-padded Cout
    # o_ref : (1, Ho, Wo, Cout_pad)  lane-dense output tile
    # x_scr : (Hp, Wp, Cin)          f32 VMEM scratch holding the zero-padded input
    _, Ho, Wo, Cout_pad = o_ref.shape
    _, H, W, Cin = x_ref.shape
    K = ksize

    # Zero-pad inside the kernel (no jnp.pad / extra HBM round trip in the wrapper).
    x_scr[...] = jnp.zeros_like(x_scr)
    x_scr[pad:pad + H, pad:pad + W, :] = x_ref[0]
    # Cast once per tile so every MXU operand is native bf16.
    xv = x_scr[...].astype(jnp.bfloat16)                          # (Hp, Wp, Cin)

    # im2col: K*K shifted windows (contiguous slices for stride==1), fused along
    # the contraction axis -> a single matmul per tile.
    taps = []
    for kh in range(K):
        for kw in range(K):
            patch = xv[kh:kh + (Ho - 1) * stride + 1:stride,
                       kw:kw + (Wo - 1) * stride + 1:stride, :]   # (Ho, Wo, Cin)
            taps.append(patch.reshape(Ho * Wo, Cin))
    cols = jnp.concatenate(taps, axis=-1)                         # (Ho*Wo, K*K*Cin)

    acc = jnp.dot(cols, w_ref[...],
                  preferred_element_type=jnp.float32)             # (Ho*Wo, Cout_pad)

    o_ref[0] = acc.reshape(Ho, Wo, Cout_pad).astype(o_ref.dtype)


def prepare_weight(w_oihw):
    """OIHW f32 -> fused im2col (K*K*Cin, Cout_pad) bf16, Cout padded to 128 lanes."""
    Cout, Cin, K, _ = w_oihw.shape
    cout_pad = _round_up(Cout, 128)
    # (kh, kw, ci, co) ordering must match the tap concat order in the kernel.
    w = jnp.transpose(w_oihw, (2, 3, 1, 0)).reshape(K * K * Cin, Cout)
    w = jnp.pad(w, ((0, 0), (0, cout_pad - Cout)))
    return w.astype(jnp.bfloat16)


def conv2d_pallas(x_nchw, w_prepped, *, ksize, cout, stride=1):
    """Matches torch.nn.Conv2d(nIn, nOut, k, stride, padding=(k-1)//2, bias=False)."""
    N, Cin, H, W = x_nchw.shape
    K = ksize
    pad = (K - 1) // 2
    Hp, Wp = H + 2 * pad, W + 2 * pad
    Ho = (H + 2 * pad - K) // stride + 1
    Wo = (W + 2 * pad - K) // stride + 1
    KKC, Cout_pad = w_prepped.shape
    assert KKC == K * K * Cin

    # NCHW -> NHWC layout glue (kept only for PyTorch API parity; an NHWC
    # end-to-end model would drop these transposes entirely).
    x_nhwc = jnp.transpose(x_nchw, (0, 2, 3, 1))                  # (N, H, W, Cin)

    kernel = functools.partial(_conv_kernel, stride=stride, ksize=K, pad=pad)

    out_nhwc = pl.pallas_call(
        kernel,
        out_shape=jax.ShapeDtypeStruct((N, Ho, Wo, Cout_pad), x_nchw.dtype),
        grid_spec=pltpu.PrefetchScalarGridSpec(
            num_scalar_prefetch=0,
            grid=(N,),  # >=2 parallel steps at batch>=2 -> both v7x TensorCores busy
            in_specs=[
                pl.BlockSpec((1, H, W, Cin), lambda n: (n, 0, 0, 0)),
                pl.BlockSpec((KKC, Cout_pad), lambda n: (0, 0)),
            ],
            out_specs=pl.BlockSpec((1, Ho, Wo, Cout_pad), lambda n: (n, 0, 0, 0)),
            scratch_shapes=[pltpu.VMEM((Hp, Wp, Cin), jnp.float32)],
        ),
        compiler_params=pltpu.CompilerParams(
            dimension_semantics=("parallel",)),
    )(x_nhwc, w_prepped)

    # Drop the lane padding and return NCHW.
    out_nhwc = out_nhwc[..., :cout]
    return jnp.transpose(out_nhwc, (0, 3, 1, 2))


class CPallas:
    """Pallas equivalent of class C: Conv2d(nIn, nOut, k, stride, padding=(k-1)//2, bias=False)."""

    def __init__(self, nIn, nOut, kSize, stride=1, key=None):
        self.stride = stride
        self.kSize = kSize
        self.nOut = nOut
        if key is None:
            key = jax.random.PRNGKey(0)
        # Deterministic Kaiming-uniform-like init (same OIHW shape as PyTorch).
        fan_in = nIn * kSize * kSize
        bound = (1.0 / fan_in) ** 0.5
        self.weight = jax.random.uniform(
            key, (nOut, nIn, kSize, kSize), jnp.float32, -bound, bound)
        # Re-layout / pad / cast the weight ONCE (not per forward call).
        self.w_prepped = prepare_weight(self.weight)

    def __call__(self, x_nchw):
        return conv2d_pallas(x_nchw, self.w_prepped, ksize=self.kSize,
                             cout=self.nOut, stride=self.stride)


if __name__ == "__main__":
    key = jax.random.PRNGKey(0)
    k_x, k_w = jax.random.split(key)

    # Small shapes consistent with the module: batch=2, nIn=4, nOut=8, 16x16, k=3, stride=1.
    N, nIn, nOut, H, W, kSize, stride = 2, 4, 8, 16, 16, 3, 1
    x = jax.random.normal(k_x, (N, nIn, H, W), jnp.float32)

    module = CPallas(nIn, nOut, kSize, stride=stride, key=k_w)
    out = jax.block_until_ready(module(x))

    # Reference conv computed from the same bf16-rounded operands the kernel
    # feeds the MXU, accumulated in f32.
    pad = (kSize - 1) // 2
    x_bf = x.astype(jnp.bfloat16).astype(jnp.float32)
    w_bf = module.weight.astype(jnp.bfloat16).astype(jnp.float32)
    ref = jax.lax.conv_general_dilated(
        x_bf, w_bf,
        window_strides=(stride, stride),
        padding=((pad, pad), (pad, pad)),
        dimension_numbers=("NCHW", "OIHW", "NCHW"))

    assert out.shape == ref.shape
    max_err = float(jnp.max(jnp.abs(out - ref)))
    assert jnp.allclose(out, ref, atol=2e-2, rtol=2e-2), f"max abs err = {max_err}"

    print("KERNEL_OK")
</pallas_src>

<mosaic_0001>
module attributes {stable_mosaic.version = 11 : i64} {
  func.func @_conv_kernel(%arg0: i32, %arg1: memref<1x16x16x4xf32, #tpu.memory_space<vmem>>, %arg2: memref<36x128xbf16, #tpu.memory_space<vmem>>, %arg3: memref<1x16x16x128xf32, #tpu.memory_space<vmem>>, %arg4: memref<18x18x4xf32, #tpu.memory_space<vmem>>) attributes {dimension_semantics = [#tpu.dimension_semantics<parallel>], iteration_bounds = array<i64: 2>, scalar_prefetch = 0 : i64, scratch_operands = 1 : i64, tpu.core_type = #tpu.core_type<tc>, window_params = [{transform_indices = @transform_0, window_bounds = array<i64: 1, 16, 16, 4>}, {pipeline_mode = #tpu.pipeline_mode<synchronous>, transform_indices = @transform_1, window_bounds = array<i64: 36, 128>}, {transform_indices = @transform_2, window_bounds = array<i64: 1, 16, 16, 128>}]} {
    %cst = arith.constant 0.000000e+00 : f32
    %0 = vector.broadcast %cst : f32 to vector<18x18x4xf32>
    %c0 = arith.constant 0 : index
    %c0_0 = arith.constant 0 : index
    %c0_1 = arith.constant 0 : index
    %1 = vector.load %arg4[%c0, %c0_0, %c0_1] : memref<18x18x4xf32, #tpu.memory_space<vmem>>, vector<18x18x4xf32>
    tpu.vector_store %arg4[%c0, %c0_0, %c0_1], %0 {strides = array<i32>} : memref<18x18x4xf32, #tpu.memory_space<vmem>>, vector<18x18x4xf32>,
    %c0_2 = arith.constant 0 : index
    %c0_3 = arith.constant 0 : index
    %c0_4 = arith.constant 0 : index
    %c0_5 = arith.constant 0 : index
    %2 = vector.load %arg1[%c0_2, %c0_3, %c0_4, %c0_5] : memref<1x16x16x4xf32, #tpu.memory_space<vmem>>, vector<1x16x16x4xf32>
    %3 = vector.shape_cast %2 : vector<1x16x16x4xf32> to vector<16x16x4xf32>
    %c1 = arith.constant 1 : index
    %c1_6 = arith.constant 1 : index
    %c0_7 = arith.constant 0 : index
    %4 = vector.load %arg4[%c1, %c1_6, %c0_7] : memref<18x18x4xf32, #tpu.memory_space<vmem>>, vector<16x16x4xf32>
    tpu.vector_store %arg4[%c1, %c1_6, %c0_7], %3 {strides = array<i32>} : memref<18x18x4xf32, #tpu.memory_space<vmem>>, vector<16x16x4xf32>,
    %c0_8 = arith.constant 0 : index
    %c0_9 = arith.constant 0 : index
    %c0_10 = arith.constant 0 : index
    %5 = vector.load %arg4[%c0_8, %c0_9, %c0_10] : memref<18x18x4xf32, #tpu.memory_space<vmem>>, vector<18x18x4xf32>
    %6 = arith.truncf %5 : vector<18x18x4xf32> to vector<18x18x4xbf16>
    %7 = vector.extract_strided_slice %6 {offsets = [0, 0, 0], sizes = [16, 16, 4], strides = [1, 1, 1]} : vector<18x18x4xbf16> to vector<16x16x4xbf16>
    %8 = vector.shape_cast %7 : vector<16x16x4xbf16> to vector<256x4xbf16>
    %9 = vector.extract_strided_slice %6 {offsets = [0, 1, 0], sizes = [16, 16, 4], strides = [1, 1, 1]} : vector<18x18x4xbf16> to vector<16x16x4xbf16>
    %10 = vector.shape_cast %9 : vector<16x16x4xbf16> to vector<256x4xbf16>
    %11 = vector.extract_strided_slice %6 {offsets = [0, 2, 0], sizes = [16, 16, 4], strides = [1, 1, 1]} : vector<18x18x4xbf16> to vector<16x16x4xbf16>
    %12 = vector.shape_cast %11 : vector<16x16x4xbf16> to vector<256x4xbf16>
    %13 = vector.extract_strided_slice %6 {offsets = [1, 0, 0], sizes = [16, 16, 4], strides = [1, 1, 1]} : vector<18x18x4xbf16> to vector<16x16x4xbf16>
    %14 = vector.shape_cast %13 : vector<16x16x4xbf16> to vector<256x4xbf16>
    %15 = vector.extract_strided_slice %6 {offsets = [1, 1, 0], sizes = [16, 16, 4], strides = [1, 1, 1]} : vector<18x18x4xbf16> to vector<16x16x4xbf16>
    %16 = vector.shape_cast %15 : vector<16x16x4xbf16> to vector<256x4xbf16>
    %17 = vector.extract_strided_slice %6 {offsets = [1, 2, 0], sizes = [16, 16, 4], strides = [1, 1, 1]} : vector<18x18x4xbf16> to vector<16x16x4xbf16>
    %18 = vector.shape_cast %17 : vector<16x16x4xbf16> to vector<256x4xbf16>
    %19 = vector.extract_strided_slice %6 {offsets = [2, 0, 0], sizes = [16, 16, 4], strides = [1, 1, 1]} : vector<18x18x4xbf16> to vector<16x16x4xbf16>
    %20 = vector.shape_cast %19 : vector<16x16x4xbf16> to vector<256x4xbf16>
    %21 = vector.extract_strided_slice %6 {offsets = [2, 1, 0], sizes = [16, 16, 4], strides = [1, 1, 1]} : vector<18x18x4xbf16> to vector<16x16x4xbf16>
    %22 = vector.shape_cast %21 : vector<16x16x4xbf16> to vector<256x4xbf16>
    %23 = vector.extract_strided_slice %6 {offsets = [2, 2, 0], sizes = [16, 16, 4], strides = [1, 1, 1]} : vector<18x18x4xbf16> to vector<16x16x4xbf16>
    %24 = vector.shape_cast %23 : vector<16x16x4xbf16> to vector<256x4xbf16>
    %25 = tpu.concatenate %8, %10, %12, %14, %16, %18, %20, %22, %24 in 1 : vector<256x4xbf16>, vector<256x4xbf16>, vector<256x4xbf16>, vector<256x4xbf16>, vector<256x4xbf16>, vector<256x4xbf16>, vector<256x4xbf16>, vector<256x4xbf16>, vector<256x4xbf16> -> vector<256x36xbf16>
    %c0_11 = arith.constant 0 : index
    %c0_12 = arith.constant 0 : index
    %26 = vector.load %arg2[%c0_11, %c0_12] : memref<36x128xbf16, #tpu.memory_space<vmem>>, vector<36x128xbf16>
    %cst_13 = arith.constant dense<0.000000e+00> : vector<256x128xf32>
    %27 = tpu.matmul %25, %26, %cst_13 {dimension_numbers = #tpu.dot_dimension_numbers<[1], [0], [0], [1], [0, 0, 1, 1], [], []>} : vector<256x36xbf16>, vector<36x128xbf16>, vector<256x128xf32> -> vector<256x128xf32>
    %28 = vector.shape_cast %27 : vector<256x128xf32> to vector<16x16x128xf32>
    %c0_14 = arith.constant 0 : index
    %c0_15 = arith.constant 0 : index
    %c0_16 = arith.constant 0 : index
    %c0_17 = arith.constant 0 : index
    %29 = vector.load %arg3[%c0_14, %c0_15, %c0_16, %c0_17] : memref<1x16x16x128xf32, #tpu.memory_space<vmem>>, vector<1x16x16x128xf32>
    %30 = vector.shape_cast %29 : vector<1x16x16x128xf32> to vector<16x16x128xf32>
    %31 = vector.shape_cast %28 : vector<16x16x128xf32> to vector<1x16x16x128xf32>
    tpu.vector_store %arg3[%c0_14, %c0_15, %c0_16, %c0_17], %31 {strides = array<i32>} : memref<1x16x16x128xf32, #tpu.memory_space<vmem>>, vector<1x16x16x128xf32>,
    return
  }
  func.func @transform_0(%arg0: i32) -> (i32, i32, i32, i32) {
    %c0_i32 = arith.constant 0 : i32
    %c0_i32_0 = arith.constant 0 : i32
    %c0_i32_1 = arith.constant 0 : i32
    %c0_i32_2 = arith.constant 0 : i32
    return %arg0, %c0_i32, %c0_i32_0, %c0_i32_1 : i32, i32, i32, i32
  }
  func.func @transform_1(%arg0: i32) -> (i32, i32) {
    %c0_i32 = arith.constant 0 : i32
    %c0_i32_0 = arith.constant 0 : i32
    %c0_i32_1 = arith.constant 0 : i32
    return %c0_i32, %c0_i32_0 : i32, i32
  }
  func.func @transform_2(%arg0: i32) -> (i32, i32, i32, i32) {
    %c0_i32 = arith.constant 0 : i32
    %c0_i32_0 = arith.constant 0 : i32
    %c0_i32_1 = arith.constant 0 : i32
    %c0_i32_2 = arith.constant 0 : i32
    return %arg0, %c0_i32, %c0_i32_0, %c0_i32_1 : i32, i32, i32, i32
  }
}

</mosaic_0001>

<llo_original>
// kernel: tpu_custom_call.1
$region0: #{tpu_custom_call.1}
  #allocation0 [shape = 'u32[]', space=smem, size = 0x4, offset = 0x4, fixed_abs, tag = 'smem constant byte address 0x4 - core index']
  #allocation1 [shape = 'u32[144,128]{1,0:T(1,128)}', space=vmem, size = 0x12000, scoped, tag = 'internal scratch']
  #allocation2 [shape = 'f32[18,18,4]{2,1,0:T(8,128)}', space=vmem, size = 0x36000, scoped, tag = 'scratch operand']
  %s0 = inlined_call_operand.vmem [shape: f32[2,16,16,4], index: 0, kind: input, shape index: {}]
  %s1 = inlined_call_operand.vmem [shape: bf16[36,128], index: 1, kind: input, shape index: {}]
  %s2 = inlined_call_operand.hbm [shape: f32[2,16,16,128], index: 2, kind: output, shape index: {}]
  %s3 = sld [smem:[#allocation0]]
  $region41: #{tpu_custom_call.1} parent=0
    _
  %s5 = ssub.s32 1, %s3
  %s6 = scalar_select 0, %s5, %s3
  $region1: #{tpu_custom_call.1} parent=0
    #allocation3 [shape = 'u8[262144]{0}', space=vmem, size = 0x40000, scoped, tag = 'output window, operand 0']
    #allocation4 [shape = 's32[2]{0}', space=sflag, size = 0x8, scoped, tag = 'scoped memory for tpu_custom_call.1']
    %7 = vsyncpa [#allocation4], 0
    %s8 = scalar_lea.sflag [#allocation4], 1
    %9 = vsyncpa %s8, 0
    loop: start=0, step=1, limit=4
    $region2: #{tpu_custom_call.1} parent=1 // loop_pre_header
      _
    $region3: #{tpu_custom_call.1} parent=1 // loop_header
      %s11 = sphi 0, %s15
      %p12 = scmp.ge.s32.totalorder %s11, 4
      %s21 = sphi 0, %s23
      %s24 = sphi 0, %s21
      %s25 = sphi 0, %s24
      %s41 = sphi 0, %s25
      %s45 = sphi 0, %s45
      %s47 = sphi 0, %s45
      %s48 = sphi 0, %s47
      %s62 = sphi 0, %s48
      %s68 = sphi 0, %s70
      %s71 = sphi 0, %s68
      %s72 = sphi 0, %s71
      %s88 = sphi 0, %s72
    $region4: #{tpu_custom_call.1} parent=1 // loop_header_branch
      %14 = sbr.rel (%p12) target = $region8
    $region5: #{tpu_custom_call.1} parent=1 // loop_body
      %s16 = ssub.s32 %s11, 1
      %s17 = ssub.s32 %s11, 2
      %s18 = sadd.s32 %s11, 1
      %s19 = ssub.s32 %s11, %s18
      %p20 = scmp.eq.s32.totalorder %s19, 0
      %s22 = sadd.s32 %s21, 1
      %s23 = scalar_select %p20, %s21, %s22
      %p26 = pneg %p20
      %p27 = scmp.eq.s32.totalorder %s11, 1
      %p28 = por %p26, %p27
      %p29 = scmp.ne.s32.totalorder %s21, %s24
      %p30 = scmp.eq.s32.totalorder %s11, 0
      %p31 = por %p29, %p30
      %p32 = scmp.ne.s32.totalorder %s21, %s24
      %p33 = scmp.eq.s32.totalorder %s16, 1
      %p34 = por %p32, %p33
      %p35 = scmp.ne.s32.totalorder %s24, %s25
      %p36 = scmp.eq.s32.totalorder %s16, 0
      %p37 = por %p35, %p36
      %p38 = scmp.ne.s32.totalorder %s24, %s25
      %p39 = scmp.eq.s32.totalorder %s17, 1
      %p40 = por %p38, %p39
      %p42 = scmp.ne.s32.totalorder %s25, %s41
      %p43 = scmp.eq.s32.totalorder %s17, 0
      %p44 = por %p42, %p43
      %s46 = sadd.s32 %s45, 1
      %p49 = scmp.eq.s32.totalorder %s11, 1
      %p50 = scmp.ne.s32.totalorder %s45, %s47
      %p51 = scmp.eq.s32.totalorder %s11, 0
      %p52 = por %p50, %p51
      %p53 = scmp.ne.s32.totalorder %s45, %s47
      %p54 = scmp.eq.s32.totalorder %s16, 1
      %p55 = por %p53, %p54
      %p56 = scmp.ne.s32.totalorder %s47, %s48
      %p57 = scmp.eq.s32.totalorder %s16, 0
      %p58 = por %p56, %p57
      %p59 = scmp.ne.s32.totalorder %s47, %s48
      %p60 = scmp.eq.s32.totalorder %s17, 1
      %p61 = por %p59, %p60
      %p63 = scmp.ne.s32.totalorder %s48, %s62
      %p64 = scmp.eq.s32.totalorder %s17, 0
      %p65 = por %p63, %p64
      %s66 = ssub.s32 %s11, %s18
      %p67 = scmp.eq.s32.totalorder %s66, 0
      %s69 = sadd.s32 %s68, 1
      %s70 = scalar_select %p67, %s68, %s69
      %p73 = pneg %p67
      %p74 = scmp.eq.s32.totalorder %s11, 1
      %p75 = por %p73, %p74
      %p76 = scmp.ne.s32.totalorder %s68, %s71
      %p77 = scmp.eq.s32.totalorder %s11, 0
      %p78 = por %p76, %p77
      %p79 = scmp.ne.s32.totalorder %s68, %s71
      %p80 = scmp.eq.s32.totalorder %s16, 1
      %p81 = por %p79, %p80
      %p82 = scmp.ne.s32.totalorder %s71, %s72
      %p83 = scmp.eq.s32.totalorder %s16, 0
      %p84 = por %p82, %p83
      %p85 = scmp.ne.s32.totalorder %s71, %s72
      %p86 = scmp.eq.s32.totalorder %s17, 1
      %p87 = por %p85, %p86
      %p89 = scmp.ne.s32.totalorder %s72, %s88
      %p90 = scmp.eq.s32.totalorder %s17, 0
      %p91 = por %p89, %p90
      %p92 = scmp.le.s32.totalorder 1, %s11
      %p93 = scmp.lt.s32.totalorder %s11, 3
      %p94 = pnand %p92, %p93
      %p95 = pneg %p94
      // Predicated region
      $region9: #{tpu_custom_call.1} parent=5 // pred_check
        _
      $region10: #{tpu_custom_call.1} parent=5 // pred_check_branch
        %97 = sbr.rel (%p94) target = $region12
      $region11: #{tpu_custom_call.1} parent=5 // pred_region
        %s98 = ssub.s32 %s11, 1
        // Predicated region
        $region13: #{tpu_custom_call.1} parent=11 // pred_check
          %p99 = pneg %p58
        $region14: #{tpu_custom_call.1} parent=11 // pred_check_branch
          %101 = sbr.rel (%p99) target = $region16
        $region15: #{tpu_custom_call.1} parent=11 // pred_region
          _
        $region16: #{tpu_custom_call.1} parent=11 // pred_fallthru
          _
      $region12: #{tpu_custom_call.1} parent=5 // pred_fallthru
        _
      %p102 = scmp.lt.s32.totalorder %s11, 2
      // Predicated region
      $region17: #{tpu_custom_call.1} parent=5 // pred_check
        %p103 = pneg %p102
      $region18: #{tpu_custom_call.1} parent=5 // pred_check_branch
        %105 = sbr.rel (%p103) target = $region20
      $region19: #{tpu_custom_call.1} parent=5 // pred_region
        // Predicated region
        $region21: #{tpu_custom_call.1} parent=19 // pred_check
          %p106 = pneg %p31
        $region22: #{tpu_custom_call.1} parent=19 // pred_check_branch
          %108 = sbr.rel (%p106) target = $region24
        $region23: #{tpu_custom_call.1} parent=19 // pred_region
          %p109 = scmp.lt.s32.totalorder %s11, 1
          %s110 = scalar_select %p109, %s11, 1
          %s111 = smul.addr %s110, 32
          %s112 = smul.addr %s111, 8
          %s113 = scalar_lea.vmem %s0, %s112
        $region24: #{tpu_custom_call.1} parent=19 // pred_fallthru
          _
      $region20: #{tpu_custom_call.1} parent=5 // pred_fallthru
        _
      %p114 = scmp.le.s32.totalorder 1, %s11
      %p115 = scmp.lt.s32.totalorder %s11, 3
      %p116 = pnand %p114, %p115
      %p117 = pneg %p116
      // Predicated region
      $region25: #{tpu_custom_call.1} parent=5 // pred_check
        _
      $region26: #{tpu_custom_call.1} parent=5 // pred_check_branch
        %119 = sbr.rel (%p116) target = $region28
      $region27: #{tpu_custom_call.1} parent=5 // pred_region
        %s120 = ssub.s32 %s11, 1
        %p121 = scmp.lt.s32.totalorder %s16, 1
        %s122 = scalar_select %p121, %s16, 1
        %s123 = smul.addr %s122, 32
        %s124 = smul.addr %s123, 8
        %s125 = scalar_lea.vmem %s0, %s124
        %p126 = pneg %p37
        %p127 = pneg %p34
        %p128 = pneg %p58
        %p129 = pneg %p55
        %p130 = pneg %p84
        %p131 = pneg %p81
        %s132 = sand.u32 %s71, 1
        %s133 = scalar_lea.sflag [#allocation4], %s132
        %s134 = sand.u32 %s71, 1
        %s135 = smul.addr %s134, 256
        %s136 = scalar_lea.vmem [#allocation3], %s135
        %p137 = scmp.lt.s32.totalorder %s16, 1
        %s138 = scalar_select %p137, %s16, 1
        %s139 = smul.addr %s138, 32
        %s140 = smul.addr %s139, 8
        %s141 = scalar_lea.vmem %s0, %s140
        %vm143 = vcmask 31744
        %144 = vst.msk [vmem:[#allocation2] sm:$0xff] %vm143, 0.0
        %145 = vst.msk [vmem:[#allocation2 + $0x8] sm:$0xff] %vm143, 0.0
        %vm146 = vcmask 25600
        %147 = vst.msk [vmem:[#allocation2 + $0x10] sm:$0x3] %vm146, 0.0
        %148 = vst.msk [vmem:[#allocation2 + $0x18] sm:$0xff] %vm143, 0.0
        %149 = vst.msk [vmem:[#allocation2 + $0x20] sm:$0xff] %vm143, 0.0
        %150 = vst.msk [vmem:[#allocation2 + $0x28] sm:$0x3] %vm146, 0.0
        %151 = vst.msk [vmem:[#allocation2 + $0x30] sm:$0xff] %vm143, 0.0
        %152 = vst.msk [vmem:[#allocation2 + $0x38] sm:$0xff] %vm143, 0.0
        %153 = vst.msk [vmem:[#allocation2 + $0x40] sm:$0x3] %vm146, 0.0
        %154 = vst.msk [vmem:[#allocation2 + $0x48] sm:$0xff] %vm143, 0.0
        %155 = vst.msk [vmem:[#allocation2 + $0x50] sm:$0xff] %vm143, 0.0
        %156 = vst.msk [vmem:[#allocation2 + $0x58] sm:$0x3] %vm146, 0.0
        %157 = vst.msk [vmem:[#allocation2 + $0x60] sm:$0xff] %vm143, 0.0
        %158 = vst.msk [vmem:[#allocation2 + $0x68] sm:$0xff] %vm143, 0.0
        %159 = vst.msk [vmem:[#allocation2 + $0x70] sm:$0x3] %vm146, 0.0
        %160 = vst.msk [vmem:[#allocation2 + $0x78] sm:$0xff] %vm143, 0.0
        %161 = vst.msk [vmem:[#allocation2 + $0x80] sm:$0xff] %vm143, 0.0
        %162 = vst.msk [vmem:[#allocation2 + $0x88] sm:$0x3] %vm146, 0.0
        %163 = vst.msk [vmem:[#allocation2 + $0x90] sm:$0xff] %vm143, 0.0
        %164 = vst.msk [vmem:[#allocation2 + $0x98] sm:$0xff] %vm143, 0.0
        %165 = vst.msk [vmem:[#allocation2 + $0xa0] sm:$0x3] %vm146, 0.0
        %166 = vst.msk [vmem:[#allocation2 + $0xa8] sm:$0xff] %vm143, 0.0
        %167 = vst.msk [vmem:[#allocation2 + $0xb0] sm:$0xff] %vm143, 0.0
        %168 = vst.msk [vmem:[#allocation2 + $0xb8] sm:$0x3] %vm146, 0.0
        %169 = vst.msk [vmem:[#allocation2 + $0xc0] sm:$0xff] %vm143, 0.0
        %170 = vst.msk [vmem:[#allocation2 + $0xc8] sm:$0xff] %vm143, 0.0
        %171 = vst.msk [vmem:[#allocation2 + $0xd0] sm:$0x3] %vm146, 0.0
        %172 = vst.msk [vmem:[#allocation2 + $0xd8] sm:$0xff] %vm143, 0.0
        %173 = vst.msk [vmem:[#allocation2 + $0xe0] sm:$0xff] %vm143, 0.0
        %174 = vst.msk [vmem:[#allocation2 + $0xe8] sm:$0x3] %vm146, 0.0
        %175 = vst.msk [vmem:[#allocation2 + $0xf0] sm:$0xff] %vm143, 0.0
        %176 = vst.msk [vmem:[#allocation2 + $0xf8] sm:$0xff] %vm143, 0.0
        %177 = vst.msk [vmem:[#allocation2 + $0x100] sm:$0x3] %vm146, 0.0
        %178 = vst.msk [vmem:[#allocation2 + $0x108] sm:$0xff] %vm143, 0.0
        %179 = vst.msk [vmem:[#allocation2 + $0x110] sm:$0xff] %vm143, 0.0
        %180 = vst.msk [vmem:[#allocation2 + $0x118] sm:$0x3] %vm146, 0.0
        %181 = vst.msk [vmem:[#allocation2 + $0x120] sm:$0xff] %vm143, 0.0
        %182 = vst.msk [vmem:[#allocation2 + $0x128] sm:$0xff] %vm143, 0.0
        %183 = vst.msk [vmem:[#allocation2 + $0x130] sm:$0x3] %vm146, 0.0
        %184 = vst.msk [vmem:[#allocation2 + $0x138] sm:$0xff] %vm143, 0.0
        %185 = vst.msk [vmem:[#allocation2 + $0x140] sm:$0xff] %vm143, 0.0
        %186 = vst.msk [vmem:[#allocation2 + $0x148] sm:$0x3] %vm146, 0.0
        %187 = vst.msk [vmem:[#allocation2 + $0x150] sm:$0xff] %vm143, 0.0
        %188 = vst.msk [vmem:[#allocation2 + $0x158] sm:$0xff] %vm143, 0.0
        %189 = vst.msk [vmem:[#allocation2 + $0x160] sm:$0x3] %vm146, 0.0
        %190 = vst.msk [vmem:[#allocation2 + $0x168] sm:$0xff] %vm143, 0.0
        %191 = vst.msk [vmem:[#allocation2 + $0x170] sm:$0xff] %vm143, 0.0
        %192 = vst.msk [vmem:[#allocation2 + $0x178] sm:$0x3] %vm146, 0.0
        %193 = vst.msk [vmem:[#allocation2 + $0x180] sm:$0xff] %vm143, 0.0
        %194 = vst.msk [vmem:[#allocation2 + $0x188] sm:$0xff] %vm143, 0.0
        %195 = vst.msk [vmem:[#allocation2 + $0x190] sm:$0x3] %vm146, 0.0
        %196 = vst.msk [vmem:[#allocation2 + $0x198] sm:$0xff] %vm143, 0.0
        %197 = vst.msk [vmem:[#allocation2 + $0x1a0] sm:$0xff] %vm143, 0.0
        %198 = vst.msk [vmem:[#allocation2 + $0x1a8] sm:$0x3] %vm146, 0.0
        %v199 = vld [vmem:[%s141] sm:$0xff]
        %v200 = vld [vmem:[%s141 + $0x8] sm:$0xff]
        %v201 = vld [vmem:[%s141 + $0x10] sm:$0xff]
        %v202 = vld [vmem:[%s141 + $0x18] sm:$0xff]
        %v203 = vld [vmem:[%s141 + $0x20] sm:$0xff]
        %v204 = vld [vmem:[%s141 + $0x28] sm:$0xff]
        %v205 = vld [vmem:[%s141 + $0x30] sm:$0xff]
        %v206 = vld [vmem:[%s141 + $0x38] sm:$0xff]
        %v207 = vld [vmem:[%s141 + $0x40] sm:$0xff]
        %v208 = vld [vmem:[%s141 + $0x48] sm:$0xff]
        %v209 = vld [vmem:[%s141 + $0x50] sm:$0xff]
        %v210 = vld [vmem:[%s141 + $0x58] sm:$0xff]
        %v211 = vld [vmem:[%s141 + $0x60] sm:$0xff]
        %v212 = vld [vmem:[%s141 + $0x68] sm:$0xff]
        %v213 = vld [vmem:[%s141 + $0x70] sm:$0xff]
        %v214 = vld [vmem:[%s141 + $0x78] sm:$0xff]
        %v215 = vld [vmem:[%s141 + $0x80] sm:$0xff]
        %v216 = vld [vmem:[%s141 + $0x88] sm:$0xff]
        %v217 = vld [vmem:[%s141 + $0x90] sm:$0xff]
        %v218 = vld [vmem:[%s141 + $0x98] sm:$0xff]
        %v219 = vld [vmem:[%s141 + $0xa0] sm:$0xff]
        %v220 = vld [vmem:[%s141 + $0xa8] sm:$0xff]
        %v221 = vld [vmem:[%s141 + $0xb0] sm:$0xff]
        %v222 = vld [vmem:[%s141 + $0xb8] sm:$0xff]
        %v223 = vld [vmem:[%s141 + $0xc0] sm:$0xff]
        %v224 = vld [vmem:[%s141 + $0xc8] sm:$0xff]
        %v225 = vld [vmem:[%s141 + $0xd0] sm:$0xff]
        %v226 = vld [vmem:[%s141 + $0xd8] sm:$0xff]
        %v227 = vld [vmem:[%s141 + $0xe0] sm:$0xff]
        %v228 = vld [vmem:[%s141 + $0xe8] sm:$0xff]
        %v229 = vld [vmem:[%s141 + $0xf0] sm:$0xff]
        %v230 = vld [vmem:[%s141 + $0xf8] sm:$0xff]
        %s231 = scalar_lea.vmem [#allocation2], 24
        %232 = vst.msk [vmem:[%s231 + $0x1] sm:$0xff] %vm143, %v199
        %233 = vst.msk [vmem:[%s231 + $0x9] sm:$0xff] %vm143, %v200
        %234 = vst.msk [vmem:[%s231 + $0x19] sm:$0xff] %vm143, %v201
        %235 = vst.msk [vmem:[%s231 + $0x21] sm:$0xff] %vm143, %v202
        %236 = vst.msk [vmem:[%s231 + $0x31] sm:$0xff] %vm143, %v203
        %237 = vst.msk [vmem:[%s231 + $0x39] sm:$0xff] %vm143, %v204
        %238 = vst.msk [vmem:[%s231 + $0x49] sm:$0xff] %vm143, %v205
        %239 = vst.msk [vmem:[%s231 + $0x51] sm:$0xff] %vm143, %v206
        %240 = vst.msk [vmem:[%s231 + $0x61] sm:$0xff] %vm143, %v207
        %241 = vst.msk [vmem:[%s231 + $0x69] sm:$0xff] %vm143, %v208
        %242 = vst.msk [vmem:[%s231 + $0x79] sm:$0xff] %vm143, %v209
        %243 = vst.msk [vmem:[%s231 + $0x81] sm:$0xff] %vm143, %v210
        %244 = vst.msk [vmem:[%s231 + $0x91] sm:$0xff] %vm143, %v211
        %245 = vst.msk [vmem:[%s231 + $0x99] sm:$0xff] %vm143, %v212
        %246 = vst.msk [vmem:[%s231 + $0xa9] sm:$0xff] %vm143, %v213
        %247 = vst.msk [vmem:[%s231 + $0xb1] sm:$0xff] %vm143, %v214
        %248 = vst.msk [vmem:[%s231 + $0xc1] sm:$0xff] %vm143, %v215
        %249 = vst.msk [vmem:[%s231 + $0xc9] sm:$0xff] %vm143, %v216
        %250 = vst.msk [vmem:[%s231 + $0xd9] sm:$0xff] %vm143, %v217
        %251 = vst.msk [vmem:[%s231 + $0xe1] sm:$0xff] %vm143, %v218
        %252 = vst.msk [vmem:[%s231 + $0xf1] sm:$0xff] %vm143, %v219
        %253 = vst.msk [vmem:[%s231 + $0xf9] sm:$0xff] %vm143, %v220
        %254 = vst.msk [vmem:[%s231 + $0x109] sm:$0xff] %vm143, %v221
        %255 = vst.msk [vmem:[%s231 + $0x111] sm:$0xff] %vm143, %v222
        %256 = vst.msk [vmem:[%s231 + $0x121] sm:$0xff] %vm143, %v223
        %257 = vst.msk [vmem:[%s231 + $0x129] sm:$0xff] %vm143, %v224
        %258 = vst.msk [vmem:[%s231 + $0x139] sm:$0xff] %vm143, %v225
        %259 = vst.msk [vmem:[%s231 + $0x141] sm:$0xff] %vm143, %v226
        %260 = vst.msk [vmem:[%s231 + $0x151] sm:$0xff] %vm143, %v227
        %261 = vst.msk [vmem:[%s231 + $0x159] sm:$0xff] %vm143, %v228
        %262 = vst.msk [vmem:[%s231 + $0x169] sm:$0xff] %vm143, %v229
        %263 = vst.msk [vmem:[%s231 + $0x171] sm:$0xff] %vm143, %v230
        %v264 = vld [vmem:[#allocation2] sm:$0xff]
        %v265 = vld [vmem:[#allocation2 + $0x8] sm:$0xff]
        %v266 = vld [vmem:[#allocation2 + $0x10] sm:$0x3]
        %v267 = vld [vmem:[#allocation2 + $0x18] sm:$0xff]
        %v268 = vld [vmem:[#allocation2 + $0x20] sm:$0xff]
        %v269 = vld [vmem:[#allocation2 + $0x28] sm:$0x3]
        %v270 = vld [vmem:[#allocation2 + $0x30] sm:$0xff]
        %v271 = vld [vmem:[#allocation2 + $0x38] sm:$0xff]
        %v272 = vld [vmem:[#allocation2 + $0x40] sm:$0x3]
        %v273 = vld [vmem:[#allocation2 + $0x48] sm:$0xff]
        %v274 = vld [vmem:[#allocation2 + $0x50] sm:$0xff]
        %v275 = vld [vmem:[#allocation2 + $0x58] sm:$0x3]
        %v276 = vld [vmem:[#allocation2 + $0x60] sm:$0xff]
        %v277 = vld [vmem:[#allocation2 + $0x68] sm:$0xff]
        %v278 = vld [vmem:[#allocation2 + $0x70] sm:$0x3]
        %v279 = vld [vmem:[#allocation2 + $0x78] sm:$0xff]
        %v280 = vld [vmem:[#allocation2 + $0x80] sm:$0xff]
        %v281 = vld [vmem:[#allocation2 + $0x88] sm:$0x3]
        %v282 = vld [vmem:[#allocation2 + $0x90] sm:$0xff]
        %v283 = vld [vmem:[#allocation2 + $0x98] sm:$0xff]
        %v284 = vld [vmem:[#allocation2 + $0xa0] sm:$0x3]
        %v285 = vld [vmem:[#allocation2 + $0xa8] sm:$0xff]
        %v286 = vld [vmem:[#allocation2 + $0xb0] sm:$0xff]
        %v287 = vld [vmem:[#allocation2 + $0xb8] sm:$0x3]
        %v288 = vld [vmem:[#allocation2 + $0xc0] sm:$0xff]
        %v289 = vld [vmem:[#allocation2 + $0xc8] sm:$0xff]
        %v290 = vld [vmem:[#allocation2 + $0xd0] sm:$0x3]
        %v291 = vld [vmem:[#allocation2 + $0xd8] sm:$0xff]
        %v292 = vld [vmem:[#allocation2 + $0xe0] sm:$0xff]
        %v293 = vld [vmem:[#allocation2 + $0xe8] sm:$0x3]
        %v294 = vld [vmem:[#allocation2 + $0xf0] sm:$0xff]
        %v295 = vld [vmem:[#allocation2 + $0xf8] sm:$0xff]
        %v296 = vld [vmem:[#allocation2 + $0x100] sm:$0x3]
        %v297 = vld [vmem:[#allocation2 + $0x108] sm:$0xff]
        %v298 = vld [vmem:[#allocation2 + $0x110] sm:$0xff]
        %v299 = vld [vmem:[#allocation2 + $0x118] sm:$0x3]
        %v300 = vld [vmem:[#allocation2 + $0x120] sm:$0xff]
        %v301 = vld [vmem:[#allocation2 + $0x128] sm:$0xff]
        %v302 = vld [vmem:[#allocation2 + $0x130] sm:$0x3]
        %v303 = vld [vmem:[#allocation2 + $0x138] sm:$0xff]
        %v304 = vld [vmem:[#allocation2 + $0x140] sm:$0xff]
        %v305 = vld [vmem:[#allocation2 + $0x148] sm:$0x3]
        %v306 = vld [vmem:[#allocation2 + $0x150] sm:$0xff]
        %v307 = vld [vmem:[#allocation2 + $0x158] sm:$0xff]
        %v308 = vld [vmem:[#allocation2 + $0x160] sm:$0x3]
        %v309 = vld [vmem:[#allocation2 + $0x168] sm:$0xff]
        %v310 = vld [vmem:[#allocation2 + $0x170] sm:$0xff]
        %v311 = vld [vmem:[#allocation2 + $0x178] sm:$0x3]
        %v312 = vld [vmem:[#allocation2 + $0x180] sm:$0xff]
        %v313 = vld [vmem:[#allocation2 + $0x188] sm:$0xff]
        %v314 = vld [vmem:[#allocation2 + $0x190] sm:$0x3]
        %v315 = vld [vmem:[#allocation2 + $0x198] sm:$0xff]
        %v316 = vld [vmem:[#allocation2 + $0x1a0] sm:$0xff]
        %v317 = vld [vmem:[#allocation2 + $0x1a8] sm:$0x3]
        %v318 = vpack.c.bf16 %v265, %v264
        %v319 = vpack.c.bf16 %v266, %v266
        %v320 = vpack.c.bf16 %v268, %v267
        %v321 = vpack.c.bf16 %v269, %v269
        %v322 = vpack.c.bf16 %v271, %v270
        %v323 = vpack.c.bf16 %v272, %v272
        %v324 = vpack.c.bf16 %v274, %v273
        %v325 = vpack.c.bf16 %v275, %v275
        %v326 = vpack.c.bf16 %v277, %v276
        %v327 = vpack.c.bf16 %v278, %v278
        %v328 = vpack.c.bf16 %v280, %v279
        %v329 = vpack.c.bf16 %v281, %v281
        %v330 = vpack.c.bf16 %v283, %v282
        %v331 = vpack.c.bf16 %v284, %v284
        %v332 = vpack.c.bf16 %v286, %v285
        %v333 = vpack.c.bf16 %v287, %v287
        %v334 = vpack.c.bf16 %v289, %v288
        %v335 = vpack.c.bf16 %v290, %v290
        %v336 = vpack.c.bf16 %v292, %v291
        %v337 = vpack.c.bf16 %v293, %v293
        %v338 = vpack.c.bf16 %v295, %v294
        %v339 = vpack.c.bf16 %v296, %v296
        %v340 = vpack.c.bf16 %v298, %v297
        %v341 = vpack.c.bf16 %v299, %v299
        %v342 = vpack.c.bf16 %v301, %v300
        %v343 = vpack.c.bf16 %v302, %v302
        %v344 = vpack.c.bf16 %v304, %v303
        %v345 = vpack.c.bf16 %v305, %v305
        %v346 = vpack.c.bf16 %v307, %v306
        %v347 = vpack.c.bf16 %v308, %v308
        %v348 = vpack.c.bf16 %v310, %v309
        %v349 = vpack.c.bf16 %v311, %v311
        %v350 = vpack.c.bf16 %v313, %v312
        %v351 = vpack.c.bf16 %v314, %v314
        %v352 = vpack.c.bf16 %v316, %v315
        %v353 = vpack.c.bf16 %v317, %v317
        %vm354 = vsmask.f32 7424
        %v356 = vshrl.u32 %v318, 16
        %v358 = vshll.u32 %v318, 16
        %v360 = vrot.slane %v358, 1
        %v361 = vor.u32 %v356, %v360
        %v363 = vshll.u32 %v319, 16
        %v365 = vrot.slane %v363, 1
        %v366 = vsel %vm354, %v361, %v365
        %v368 = vshrl.u32 %v320, 16
        %v370 = vshll.u32 %v320, 16
        %v372 = vrot.slane %v370, 1
        %v373 = vor.u32 %v368, %v372
        %v375 = vshll.u32 %v321, 16
        %v377 = vrot.slane %v375, 1
        %v378 = vsel %vm354, %v373, %v377
        %v380 = vshrl.u32 %v322, 16
        %v382 = vshll.u32 %v322, 16
        %v384 = vrot.slane %v382, 1
        %v385 = vor.u32 %v380, %v384
        %v387 = vshll.u32 %v323, 16
        %v389 = vrot.slane %v387, 1
        %v390 = vsel %vm354, %v385, %v389
        %v392 = vshrl.u32 %v324, 16
        %v394 = vshll.u32 %v324, 16
        %v396 = vrot.slane %v394, 1
        %v397 = vor.u32 %v392, %v396
        %v399 = vshll.u32 %v325, 16
        %v401 = vrot.slane %v399, 1
        %v402 = vsel %vm354, %v397, %v401
        %v404 = vshrl.u32 %v326, 16
        %v406 = vshll.u32 %v326, 16
        %v408 = vrot.slane %v406, 1
        %v409 = vor.u32 %v404, %v408
        %v411 = vshll.u32 %v327, 16
        %v413 = vrot.slane %v411, 1
        %v414 = vsel %vm354, %v409, %v413
        %v416 = vshrl.u32 %v328, 16
        %v418 = vshll.u32 %v328, 16
        %v420 = vrot.slane %v418, 1
        %v421 = vor.u32 %v416, %v420
        %v423 = vshll.u32 %v329, 16
        %v425 = vrot.slane %v423, 1
        %v426 = vsel %vm354, %v421, %v425
        %v428 = vshrl.u32 %v330, 16
        %v430 = vshll.u32 %v330, 16
        %v432 = vrot.slane %v430, 1
        %v433 = vor.u32 %v428, %v432
        %v435 = vshll.u32 %v331, 16
        %v437 = vrot.slane %v435, 1
        %v438 = vsel %vm354, %v433, %v437
        %v440 = vshrl.u32 %v332, 16
        %v442 = vshll.u32 %v332, 16
        %v444 = vrot.slane %v442, 1
        %v445 = vor.u32 %v440, %v444
        %v447 = vshll.u32 %v333, 16
        %v449 = vrot.slane %v447, 1
        %v450 = vsel %vm354, %v445, %v449
        %v452 = vshrl.u32 %v334, 16
        %v454 = vshll.u32 %v334, 16
        %v456 = vrot.slane %v454, 1
        %v457 = vor.u32 %v452, %v456
        %v459 = vshll.u32 %v335, 16
        %v461 = vrot.slane %v459, 1
        %v462 = vsel %vm354, %v457, %v461
        %v464 = vshrl.u32 %v336, 16
        %v466 = vshll.u32 %v336, 16
        %v468 = vrot.slane %v466, 1
        %v469 = vor.u32 %v464, %v468
        %v471 = vshll.u32 %v337, 16
        %v473 = vrot.slane %v471, 1
        %v474 = vsel %vm354, %v469, %v473
        %v476 = vshrl.u32 %v338, 16
        %v478 = vshll.u32 %v338, 16
        %v480 = vrot.slane %v478, 1
        %v481 = vor.u32 %v476, %v480
        %v483 = vshll.u32 %v339, 16
        %v485 = vrot.slane %v483, 1
        %v486 = vsel %vm354, %v481, %v485
        %v488 = vshrl.u32 %v340, 16
        %v490 = vshll.u32 %v340, 16
        %v492 = vrot.slane %v490, 1
        %v493 = vor.u32 %v488, %v492
        %v495 = vshll.u32 %v341, 16
        %v497 = vrot.slane %v495, 1
        %v498 = vsel %vm354, %v493, %v497
        %v500 = vshrl.u32 %v342, 16
        %v502 = vshll.u32 %v342, 16
        %v504 = vrot.slane %v502, 1
        %v505 = vor.u32 %v500, %v504
        %v507 = vshll.u32 %v343, 16
        %v509 = vrot.slane %v507, 1
        %v510 = vsel %vm354, %v505, %v509
        %v512 = vshrl.u32 %v344, 16
        %v514 = vshll.u32 %v344, 16
        %v516 = vrot.slane %v514, 1
        %v517 = vor.u32 %v512, %v516
        %v519 = vshll.u32 %v345, 16
        %v521 = vrot.slane %v519, 1
        %v522 = vsel %vm354, %v517, %v521
        %v524 = vshrl.u32 %v346, 16
        %v526 = vshll.u32 %v346, 16
        %v528 = vrot.slane %v526, 1
        %v529 = vor.u32 %v524, %v528
        %v531 = vshll.u32 %v347, 16
        %v533 = vrot.slane %v531, 1
        %v534 = vsel %vm354, %v529, %v533
        %v536 = vshrl.u32 %v348, 16
        %v538 = vshll.u32 %v348, 16
        %v540 = vrot.slane %v538, 1
        %v541 = vor.u32 %v536, %v540
        %v543 = vshll.u32 %v349, 16
        %v545 = vrot.slane %v543, 1
        %v546 = vsel %vm354, %v541, %v545
        %vm579 = vcmask 1046528
        %v580 = vrot.slane %v318, 1
        %v581 = vrot.slane %v319, 1
        %v582 = vsel %vm579, %v580, %v581
        %v583 = vrot.slane %v320, 1
        %v584 = vrot.slane %v321, 1
        %v585 = vsel %vm579, %v583, %v584
        %v586 = vrot.slane %v322, 1
        %v587 = vrot.slane %v323, 1
        %v588 = vsel %vm579, %v586, %v587
        %v589 = vrot.slane %v324, 1
        %v590 = vrot.slane %v325, 1
        %v591 = vsel %vm579, %v589, %v590
        %v592 = vrot.slane %v326, 1
        %v593 = vrot.slane %v327, 1
        %v594 = vsel %vm579, %v592, %v593
        %v595 = vrot.slane %v328, 1
        %v596 = vrot.slane %v329, 1
        %v597 = vsel %vm579, %v595, %v596
        %v598 = vrot.slane %v330, 1
        %v599 = vrot.slane %v331, 1
        %v600 = vsel %vm579, %v598, %v599
        %v601 = vrot.slane %v332, 1
        %v602 = vrot.slane %v333, 1
        %v603 = vsel %vm579, %v601, %v602
        %v604 = vrot.slane %v334, 1
        %v605 = vrot.slane %v335, 1
        %v606 = vsel %vm579, %v604, %v605
        %v607 = vrot.slane %v336, 1
        %v608 = vrot.slane %v337, 1
        %v609 = vsel %vm579, %v607, %v608
        %v610 = vrot.slane %v338, 1
        %v611 = vrot.slane %v339, 1
        %v612 = vsel %vm579, %v610, %v611
        %v613 = vrot.slane %v340, 1
        %v614 = vrot.slane %v341, 1
        %v615 = vsel %vm579, %v613, %v614
        %v616 = vrot.slane %v342, 1
        %v617 = vrot.slane %v343, 1
        %v618 = vsel %vm579, %v616, %v617
        %v619 = vrot.slane %v344, 1
        %v620 = vrot.slane %v345, 1
        %v621 = vsel %vm579, %v619, %v620
        %v622 = vrot.slane %v346, 1
        %v623 = vrot.slane %v347, 1
        %v624 = vsel %vm579, %v622, %v623
        %v625 = vrot.slane %v348, 1
        %v626 = vrot.slane %v349, 1
        %v627 = vsel %vm579, %v625, %v626
        %v629 = vshrl.u32 %v350, 16
        %v631 = vshll.u32 %v350, 16
        %v633 = vrot.slane %v631, 1
        %v634 = vor.u32 %v629, %v633
        %v636 = vshll.u32 %v351, 16
        %v638 = vrot.slane %v636, 1
        %v639 = vsel %vm354, %v634, %v638
        %v642 = vrot.slane %v350, 1
        %v643 = vrot.slane %v351, 1
        %v644 = vsel %vm579, %v642, %v643
        %v646 = vshrl.u32 %v352, 16
        %v648 = vshll.u32 %v352, 16
        %v650 = vrot.slane %v648, 1
        %v651 = vor.u32 %v646, %v650
        %v653 = vshll.u32 %v353, 16
        %v655 = vrot.slane %v653, 1
        %v656 = vsel %vm354, %v651, %v655
        %v659 = vrot.slane %v352, 1
        %v660 = vrot.slane %v353, 1
        %v661 = vsel %vm579, %v659, %v660
        %662 = vrot.lane.b32.xlu0 %v366, 4
        %v663 = vpop.permute.xlu0 %662
        %664 = vrot.lane.b32.xlu0 %v378, 4
        %v665 = vpop.permute.xlu0 %664
        %666 = vrot.lane.b32.xlu0 %v390, 4
        %v667 = vpop.permute.xlu0 %666
        %668 = vrot.lane.b32.xlu0 %v402, 4
        %v669 = vpop.permute.xlu0 %668
        %670 = vrot.lane.b32.xlu0 %v414, 4
        %v671 = vpop.permute.xlu0 %670
        %672 = vrot.lane.b32.xlu0 %v426, 4
        %v673 = vpop.permute.xlu0 %672
        %674 = vrot.lane.b32.xlu0 %v438, 4
        %v675 = vpop.permute.xlu0 %674
        %676 = vrot.lane.b32.xlu0 %v450, 4
        %v677 = vpop.permute.xlu0 %676
        %678 = vrot.lane.b32.xlu0 %v462, 4
        %v679 = vpop.permute.xlu0 %678
        %680 = vrot.lane.b32.xlu0 %v474, 4
        %v681 = vpop.permute.xlu0 %680
        %682 = vrot.lane.b32.xlu0 %v486, 4
        %v683 = vpop.permute.xlu0 %682
        %684 = vrot.lane.b32.xlu0 %v498, 4
        %v685 = vpop.permute.xlu0 %684
        %686 = vrot.lane.b32.xlu0 %v510, 4
        %v687 = vpop.permute.xlu0 %686
        %688 = vrot.lane.b32.xlu0 %v522, 4
        %v689 = vpop.permute.xlu0 %688
        %690 = vrot.lane.b32.xlu0 %v534, 4
        %v691 = vpop.permute.xlu0 %690
        %692 = vrot.lane.b32.xlu0 %v546, 4
        %v693 = vpop.permute.xlu0 %692
        %694 = vrot.lane.b32.xlu0 %v582, 8
        %v695 = vpop.permute.xlu0 %694
        %696 = vrot.lane.b32.xlu0 %v585, 8
        %v697 = vpop.permute.xlu0 %696
        %698 = vrot.lane.b32.xlu0 %v588, 8
        %v699 = vpop.permute.xlu0 %698
        %700 = vrot.lane.b32.xlu0 %v591, 8
        %v701 = vpop.permute.xlu0 %700
        %702 = vrot.lane.b32.xlu0 %v594, 8
        %v703 = vpop.permute.xlu0 %702
        %704 = vrot.lane.b32.xlu0 %v597, 8
        %v705 = vpop.permute.xlu0 %704
        %706 = vrot.lane.b32.xlu0 %v600, 8
        %v707 = vpop.permute.xlu0 %706
        %708 = vrot.lane.b32.xlu0 %v603, 8
        %v709 = vpop.permute.xlu0 %708
        %710 = vrot.lane.b32.xlu0 %v606, 8
        %v711 = vpop.permute.xlu0 %710
        %712 = vrot.lane.b32.xlu0 %v609, 8
        %v713 = vpop.permute.xlu0 %712
        %714 = vrot.lane.b32.xlu0 %v612, 8
        %v715 = vpop.permute.xlu0 %714
        %716 = vrot.lane.b32.xlu0 %v615, 8
        %v717 = vpop.permute.xlu0 %716
        %718 = vrot.lane.b32.xlu0 %v618, 8
        %v719 = vpop.permute.xlu0 %718
        %720 = vrot.lane.b32.xlu0 %v621, 8
        %v721 = vpop.permute.xlu0 %720
        %722 = vrot.lane.b32.xlu0 %v624, 8
        %v723 = vpop.permute.xlu0 %722
        %724 = vrot.lane.b32.xlu0 %v627, 8
        %v725 = vpop.permute.xlu0 %724
        %726 = vrot.lane.b32.xlu0 %v320, 12
        %v727 = vpop.permute.xlu0 %726
        %728 = vrot.lane.b32.xlu0 %v322, 12
        %v729 = vpop.permute.xlu0 %728
        %730 = vrot.lane.b32.xlu0 %v324, 12
        %v731 = vpop.permute.xlu0 %730
        %732 = vrot.lane.b32.xlu0 %v326, 12
        %v733 = vpop.permute.xlu0 %732
        %734 = vrot.lane.b32.xlu0 %v328, 12
        %v735 = vpop.permute.xlu0 %734
        %736 = vrot.lane.b32.xlu0 %v330, 12
        %v737 = vpop.permute.xlu0 %736
        %738 = vrot.lane.b32.xlu0 %v332, 12
        %v739 = vpop.permute.xlu0 %738
        %740 = vrot.lane.b32.xlu0 %v334, 12
        %v741 = vpop.permute.xlu0 %740
        %742 = vrot.lane.b32.xlu0 %v336, 12
        %v743 = vpop.permute.xlu0 %742
        %744 = vrot.lane.b32.xlu0 %v338, 12
        %v745 = vpop.permute.xlu0 %744
        %746 = vrot.lane.b32.xlu0 %v340, 12
        %v747 = vpop.permute.xlu0 %746
        %748 = vrot.lane.b32.xlu0 %v342, 12
        %v749 = vpop.permute.xlu0 %748
        %750 = vrot.lane.b32.xlu0 %v344, 12
        %v751 = vpop.permute.xlu0 %750
        %752 = vrot.lane.b32.xlu0 %v346, 12
        %v753 = vpop.permute.xlu0 %752
        %754 = vrot.lane.b32.xlu0 %v348, 12
        %v755 = vpop.permute.xlu0 %754
        %756 = vrot.lane.b32.xlu0 %v350, 12
        %v757 = vpop.permute.xlu0 %756
        %758 = vrot.lane.b32.xlu0 %v378, 16
        %v759 = vpop.permute.xlu0 %758
        %760 = vrot.lane.b32.xlu0 %v390, 16
        %v761 = vpop.permute.xlu0 %760
        %762 = vrot.lane.b32.xlu0 %v402, 16
        %v763 = vpop.permute.xlu0 %762
        %764 = vrot.lane.b32.xlu0 %v414, 16
        %v765 = vpop.permute.xlu0 %764
        %766 = vrot.lane.b32.xlu0 %v426, 16
        %v767 = vpop.permute.xlu0 %766
        %768 = vrot.lane.b32.xlu0 %v438, 16
        %v769 = vpop.permute.xlu0 %768
        %770 = vrot.lane.b32.xlu0 %v450, 16
        %v771 = vpop.permute.xlu0 %770
        %772 = vrot.lane.b32.xlu0 %v462, 16
        %v773 = vpop.permute.xlu0 %772
        %774 = vrot.lane.b32.xlu0 %v474, 16
        %v775 = vpop.permute.xlu0 %774
        %776 = vrot.lane.b32.xlu0 %v486, 16
        %v777 = vpop.permute.xlu0 %776
        %778 = vrot.lane.b32.xlu0 %v498, 16
        %v779 = vpop.permute.xlu0 %778
        %780 = vrot.lane.b32.xlu0 %v510, 16
        %v781 = vpop.permute.xlu0 %780
        %782 = vrot.lane.b32.xlu0 %v522, 16
        %v783 = vpop.permute.xlu0 %782
        %784 = vrot.lane.b32.xlu0 %v534, 16
        %v785 = vpop.permute.xlu0 %784
        %786 = vrot.lane.b32.xlu0 %v546, 16
        %v787 = vpop.permute.xlu0 %786
        %788 = vrot.lane.b32.xlu0 %v639, 16
        %v789 = vpop.permute.xlu0 %788
        %790 = vrot.lane.b32.xlu0 %v585, 20
        %v791 = vpop.permute.xlu0 %790
        %792 = vrot.lane.b32.xlu0 %v588, 20
        %v793 = vpop.permute.xlu0 %792
        %794 = vrot.lane.b32.xlu0 %v591, 20
        %v795 = vpop.permute.xlu0 %794
        %796 = vrot.lane.b32.xlu0 %v594, 20
        %v797 = vpop.permute.xlu0 %796
        %798 = vrot.lane.b32.xlu0 %v597, 20
        %v799 = vpop.permute.xlu0 %798
        %800 = vrot.lane.b32.xlu0 %v600, 20
        %v801 = vpop.permute.xlu0 %800
        %802 = vrot.lane.b32.xlu0 %v603, 20
        %v803 = vpop.permute.xlu0 %802
        %804 = vrot.lane.b32.xlu0 %v606, 20
        %v805 = vpop.permute.xlu0 %804
        %806 = vrot.lane.b32.xlu0 %v609, 20
        %v807 = vpop.permute.xlu0 %806
        %808 = vrot.lane.b32.xlu0 %v612, 20
        %v809 = vpop.permute.xlu0 %808
        %810 = vrot.lane.b32.xlu0 %v615, 20
        %v811 = vpop.permute.xlu0 %810
        %812 = vrot.lane.b32.xlu0 %v618, 20
        %v813 = vpop.permute.xlu0 %812
        %814 = vrot.lane.b32.xlu0 %v621, 20
        %v815 = vpop.permute.xlu0 %814
        %816 = vrot.lane.b32.xlu0 %v624, 20
        %v817 = vpop.permute.xlu0 %816
        %818 = vrot.lane.b32.xlu0 %v627, 20
        %v819 = vpop.permute.xlu0 %818
        %820 = vrot.lane.b32.xlu0 %v644, 20
        %v821 = vpop.permute.xlu0 %820
        %822 = vrot.lane.b32.xlu0 %v322, 24
        %v823 = vpop.permute.xlu0 %822
        %824 = vrot.lane.b32.xlu0 %v324, 24
        %v825 = vpop.permute.xlu0 %824
        %826 = vrot.lane.b32.xlu0 %v326, 24
        %v827 = vpop.permute.xlu0 %826
        %828 = vrot.lane.b32.xlu0 %v328, 24
        %v829 = vpop.permute.xlu0 %828
        %830 = vrot.lane.b32.xlu0 %v330, 24
        %v831 = vpop.permute.xlu0 %830
        %832 = vrot.lane.b32.xlu0 %v332, 24
        %v833 = vpop.permute.xlu0 %832
        %834 = vrot.lane.b32.xlu0 %v334, 24
        %v835 = vpop.permute.xlu0 %834
        %836 = vrot.lane.b32.xlu0 %v336, 24
        %v837 = vpop.permute.xlu0 %836
        %838 = vrot.lane.b32.xlu0 %v338, 24
        %v839 = vpop.permute.xlu0 %838
        %840 = vrot.lane.b32.xlu0 %v340, 24
        %v841 = vpop.permute.xlu0 %840
        %842 = vrot.lane.b32.xlu0 %v342, 24
        %v843 = vpop.permute.xlu0 %842
        %844 = vrot.lane.b32.xlu0 %v344, 24
        %v845 = vpop.permute.xlu0 %844
        %846 = vrot.lane.b32.xlu0 %v346, 24
        %v847 = vpop.permute.xlu0 %846
        %848 = vrot.lane.b32.xlu0 %v348, 24
        %v849 = vpop.permute.xlu0 %848
        %850 = vrot.lane.b32.xlu0 %v350, 24
        %v851 = vpop.permute.xlu0 %850
        %852 = vrot.lane.b32.xlu0 %v352, 24
        %v853 = vpop.permute.xlu0 %852
        %854 = vrot.lane.b32.xlu0 %v390, 28
        %v855 = vpop.permute.xlu0 %854
        %856 = vrot.lane.b32.xlu0 %v402, 28
        %v857 = vpop.permute.xlu0 %856
        %858 = vrot.lane.b32.xlu0 %v414, 28
        %v859 = vpop.permute.xlu0 %858
        %860 = vrot.lane.b32.xlu0 %v426, 28
        %v861 = vpop.permute.xlu0 %860
        %862 = vrot.lane.b32.xlu0 %v438, 28
        %v863 = vpop.permute.xlu0 %862
        %864 = vrot.lane.b32.xlu0 %v450, 28
        %v865 = vpop.permute.xlu0 %864
        %866 = vrot.lane.b32.xlu0 %v462, 28
        %v867 = vpop.permute.xlu0 %866
        %868 = vrot.lane.b32.xlu0 %v474, 28
        %v869 = vpop.permute.xlu0 %868
        %870 = vrot.lane.b32.xlu0 %v486, 28
        %v871 = vpop.permute.xlu0 %870
        %872 = vrot.lane.b32.xlu0 %v498, 28
        %v873 = vpop.permute.xlu0 %872
        %874 = vrot.lane.b32.xlu0 %v510, 28
        %v875 = vpop.permute.xlu0 %874
        %876 = vrot.lane.b32.xlu0 %v522, 28
        %v877 = vpop.permute.xlu0 %876
        %878 = vrot.lane.b32.xlu0 %v534, 28
        %v879 = vpop.permute.xlu0 %878
        %880 = vrot.lane.b32.xlu0 %v546, 28
        %v881 = vpop.permute.xlu0 %880
        %882 = vrot.lane.b32.xlu0 %v639, 28
        %v883 = vpop.permute.xlu0 %882
        %884 = vrot.lane.b32.xlu0 %v656, 28
        %v885 = vpop.permute.xlu0 %884
        %886 = vrot.lane.b32.xlu0 %v588, 32
        %v887 = vpop.permute.xlu0 %886
        %888 = vrot.lane.b32.xlu0 %v591, 32
        %v889 = vpop.permute.xlu0 %888
        %890 = vrot.lane.b32.xlu0 %v594, 32
        %v891 = vpop.permute.xlu0 %890
        %892 = vrot.lane.b32.xlu0 %v597, 32
        %v893 = vpop.permute.xlu0 %892
        %894 = vrot.lane.b32.xlu0 %v600, 32
        %v895 = vpop.permute.xlu0 %894
        %896 = vrot.lane.b32.xlu0 %v603, 32
        %v897 = vpop.permute.xlu0 %896
        %898 = vrot.lane.b32.xlu0 %v606, 32
        %v899 = vpop.permute.xlu0 %898
        %900 = vrot.lane.b32.xlu0 %v609, 32
        %v901 = vpop.permute.xlu0 %900
        %902 = vrot.lane.b32.xlu0 %v612, 32
        %v903 = vpop.permute.xlu0 %902
        %904 = vrot.lane.b32.xlu0 %v615, 32
        %v905 = vpop.permute.xlu0 %904
        %906 = vrot.lane.b32.xlu0 %v618, 32
        %v907 = vpop.permute.xlu0 %906
        %908 = vrot.lane.b32.xlu0 %v621, 32
        %v909 = vpop.permute.xlu0 %908
        %910 = vrot.lane.b32.xlu0 %v624, 32
        %v911 = vpop.permute.xlu0 %910
        %912 = vrot.lane.b32.xlu0 %v627, 32
        %v913 = vpop.permute.xlu0 %912
        %914 = vrot.lane.b32.xlu0 %v644, 32
        %v915 = vpop.permute.xlu0 %914
        %916 = vrot.lane.b32.xlu0 %v661, 32
        %v917 = vpop.permute.xlu0 %916
        %v919 = vsel %vm143, %v318, %v663
        %v921 = vsel %vm143, %v320, %v665
        %v923 = vsel %vm143, %v322, %v667
        %v925 = vsel %vm143, %v324, %v669
        %v927 = vsel %vm143, %v326, %v671
        %v929 = vsel %vm143, %v328, %v673
        %v931 = vsel %vm143, %v330, %v675
        %v933 = vsel %vm143, %v332, %v677
        %v935 = vsel %vm143, %v334, %v679
        %v937 = vsel %vm143, %v336, %v681
        %v939 = vsel %vm143, %v338, %v683
        %v941 = vsel %vm143, %v340, %v685
        %v943 = vsel %vm143, %v342, %v687
        %v945 = vsel %vm143, %v344, %v689
        %v947 = vsel %vm143, %v346, %v691
        %v949 = vsel %vm143, %v348, %v693
        %vm950 = vcmask 64512
        %v952 = vsel %vm950, %v919, %v695
        %v954 = vsel %vm950, %v921, %v697
        %v956 = vsel %vm950, %v923, %v699
        %v958 = vsel %vm950, %v925, %v701
        %v960 = vsel %vm950, %v927, %v703
        %v962 = vsel %vm950, %v929, %v705
        %v964 = vsel %vm950, %v931, %v707
        %v966 = vsel %vm950, %v933, %v709
        %v968 = vsel %vm950, %v935, %v711
        %v970 = vsel %vm950, %v937, %v713
        %v972 = vsel %vm950, %v939, %v715
        %v974 = vsel %vm950, %v941, %v717
        %v976 = vsel %vm950, %v943, %v719
        %v978 = vsel %vm950, %v945, %v721
        %v980 = vsel %vm950, %v947, %v723
        %v982 = vsel %vm950, %v949, %v725
        %vm983 = vcmask 97280
        %v985 = vsel %vm983, %v952, %v727
        %v987 = vsel %vm983, %v954, %v729
        %v989 = vsel %vm983, %v956, %v731
        %v991 = vsel %vm983, %v958, %v733
        %v993 = vsel %vm983, %v960, %v735
        %v995 = vsel %vm983, %v962, %v737
        %v997 = vsel %vm983, %v964, %v739
        %v999 = vsel %vm983, %v966, %v741
        %v1001 = vsel %vm983, %v968, %v743
        %v1003 = vsel %vm983, %v970, %v745
        %v1005 = vsel %vm983, %v972, %v747
        %v1007 = vsel %vm983, %v974, %v749
        %v1009 = vsel %vm983, %v976, %v751
        %v1011 = vsel %vm983, %v978, %v753
        %v1013 = vsel %vm983, %v980, %v755
        %v1015 = vsel %vm983, %v982, %v757
        %vm1016 = vcmask 130048
        %v1018 = vsel %vm1016, %v985, %v759
        %v1020 = vsel %vm1016, %v987, %v761
        %v1022 = vsel %vm1016, %v989, %v763
        %v1024 = vsel %vm1016, %v991, %v765
        %v1026 = vsel %vm1016, %v993, %v767
        %v1028 = vsel %vm1016, %v995, %v769
        %v1030 = vsel %vm1016, %v997, %v771
        %v1032 = vsel %vm1016, %v999, %v773
        %v1034 = vsel %vm1016, %v1001, %v775
        %v1036 = vsel %vm1016, %v1003, %v777
        %v1038 = vsel %vm1016, %v1005, %v779
        %v1040 = vsel %vm1016, %v1007, %v781
        %v1042 = vsel %vm1016, %v1009, %v783
        %v1044 = vsel %vm1016, %v1011, %v785
        %v1046 = vsel %vm1016, %v1013, %v787
        %v1048 = vsel %vm1016, %v1015, %v789
        %vm1049 = vcmask 162816
        %v1051 = vsel %vm1049, %v1018, %v791
        %v1053 = vsel %vm1049, %v1020, %v793
        %v1055 = vsel %vm1049, %v1022, %v795
        %v1057 = vsel %vm1049, %v1024, %v797
        %v1059 = vsel %vm1049, %v1026, %v799
        %v1061 = vsel %vm1049, %v1028, %v801
        %v1063 = vsel %vm1049, %v1030, %v803
        %v1065 = vsel %vm1049, %v1032, %v805
        %v1067 = vsel %vm1049, %v1034, %v807
        %v1069 = vsel %vm1049, %v1036, %v809
        %v1071 = vsel %vm1049, %v1038, %v811
        %v1073 = vsel %vm1049, %v1040, %v813
        %v1075 = vsel %vm1049, %v1042, %v815
        %v1077 = vsel %vm1049, %v1044, %v817
        %v1079 = vsel %vm1049, %v1046, %v819
        %v1081 = vsel %vm1049, %v1048, %v821
        %vm1082 = vcmask 195584
        %v1084 = vsel %vm1082, %v1051, %v823
        %v1086 = vsel %vm1082, %v1053, %v825
        %v1088 = vsel %vm1082, %v1055, %v827
        %v1090 = vsel %vm1082, %v1057, %v829
        %v1092 = vsel %vm1082, %v1059, %v831
        %v1094 = vsel %vm1082, %v1061, %v833
        %v1096 = vsel %vm1082, %v1063, %v835
        %v1098 = vsel %vm1082, %v1065, %v837
        %v1100 = vsel %vm1082, %v1067, %v839
        %v1102 = vsel %vm1082, %v1069, %v841
        %v1104 = vsel %vm1082, %v1071, %v843
        %v1106 = vsel %vm1082, %v1073, %v845
        %v1108 = vsel %vm1082, %v1075, %v847
        %v1110 = vsel %vm1082, %v1077, %v849
        %v1112 = vsel %vm1082, %v1079, %v851
        %v1114 = vsel %vm1082, %v1081, %v853
        %vm1115 = vcmask 228352
        %v1117 = vsel %vm1115, %v1084, %v855
        %v1119 = vsel %vm1115, %v1086, %v857
        %v1121 = vsel %vm1115, %v1088, %v859
        %v1123 = vsel %vm1115, %v1090, %v861
        %v1125 = vsel %vm1115, %v1092, %v863
        %v1127 = vsel %vm1115, %v1094, %v865
        %v1129 = vsel %vm1115, %v1096, %v867
        %v1131 = vsel %vm1115, %v1098, %v869
        %v1133 = vsel %vm1115, %v1100, %v871
        %v1135 = vsel %vm1115, %v1102, %v873
        %v1137 = vsel %vm1115, %v1104, %v875
        %v1139 = vsel %vm1115, %v1106, %v877
        %v1141 = vsel %vm1115, %v1108, %v879
        %v1143 = vsel %vm1115, %v1110, %v881
        %v1145 = vsel %vm1115, %v1112, %v883
        %v1147 = vsel %vm1115, %v1114, %v885
        %vm1148 = vcmask 261120
        %v1150 = vsel %vm1148, %v1117, %v887
        %v1152 = vsel %vm1148, %v1119, %v889
        %v1154 = vsel %vm1148, %v1121, %v891
        %v1156 = vsel %vm1148, %v1123, %v893
        %v1158 = vsel %vm1148, %v1125, %v895
        %v1160 = vsel %vm1148, %v1127, %v897
        %v1162 = vsel %vm1148, %v1129, %v899
        %v1164 = vsel %vm1148, %v1131, %v901
        %v1166 = vsel %vm1148, %v1133, %v903
        %v1168 = vsel %vm1148, %v1135, %v905
        %v1170 = vsel %vm1148, %v1137, %v907
        %v1172 = vsel %vm1148, %v1139, %v909
        %v1174 = vsel %vm1148, %v1141, %v911
        %v1176 = vsel %vm1148, %v1143, %v913
        %v1178 = vsel %vm1148, %v1145, %v915
        %v1180 = vsel %vm1148, %v1147, %v917
        %v1181 = vld [vmem:[%s1] sm:$0xf]
        %v1182 = vld [vmem:[%s1 + $0x4] sm:$0xf]
        %v1183 = vld [vmem:[%s1 + $0x8] sm:$0xf]
        %v1184 = vld [vmem:[%s1 + $0xc] sm:$0xf]
        %v1185 = vld [vmem:[%s1 + $0x10] sm:$0x3]
        %v1191 = vunpack.c.l.b16 %v1181
        %v1192 = vunpack.c.l.b16 %v1182
        %v1193 = vunpack.c.l.b16 %v1183
        %v1194 = vunpack.c.l.b16 %v1184
        %v1195 = vunpack.c.l.b16 %v1185
        %v1196 = vpack.c.b16 %v1192, %v1191
        %v1197 = vpack.c.b16 %v1194, %v1193
        %v1198 = vpack.c.b16 %v1195, %v1195
        %vm1201 = vcmask 293888
        %v1202 = vsel %vm1201, %v1150, 0
        %v1204 = vsel %vm1201, %v1152, 0
        %v1206 = vsel %vm1201, %v1154, 0
        %v1208 = vsel %vm1201, %v1156, 0
        %v1210 = vsel %vm1201, %v1158, 0
        %v1212 = vsel %vm1201, %v1160, 0
        %v1214 = vsel %vm1201, %v1162, 0
        %v1216 = vsel %vm1201, %v1164, 0
        %v1218 = vsel %vm1201, %v1166, 0
        %v1220 = vsel %vm1201, %v1168, 0
        %v1222 = vsel %vm1201, %v1170, 0
        %v1224 = vsel %vm1201, %v1172, 0
        %v1226 = vsel %vm1201, %v1174, 0
        %v1228 = vsel %vm1201, %v1176, 0
        %v1230 = vsel %vm1201, %v1178, 0
        %v1232 = vsel %vm1201, %v1180, 0
        %vm1234 = vcmask 1041408
        %v1236 = vsel %vm1234, %v1198, 0
        %1238 = vmatprep.subr.bf16.mxu0 0
        %1239 = vmatpush1.bf16.msra.mxu0 0
        %1240 = vmatprep.subr.bf16.mxu0 0
        %1241 = vmatpush1.bf16.msra.mxu0 0
        %1242 = vmatprep.subr.bf16.mxu0 0
        %1243 = vmatpush1.bf16.msra.mxu0 0
        %1244 = vmatprep.subr.bf16.mxu0 0
        %1245 = vmatpush1.bf16.msra.mxu0 0
        %1246 = vmatprep.subr.bf16.mxu0 0
        %1247 = vmatpush1.bf16.msra.mxu0 0
        %1248 = vmatprep.subr.bf16.mxu0 0
        %1249 = vmatpush1.bf16.msra.mxu0 %v1236
        %1250 = vmatprep.subr.bf16.mxu0 0
        %1251 = vmatpush1.bf16.msra.mxu0 %v1197
        %1252 = vmatprep.subr.bf16.mxu0 0
        %1253 = vmatpush1.bf16.msra.mxu0 %v1196
        %1254 = vmatprep.subr.bf16.mxu0 0
        %1255 = vmatpush2.bf16.msra.mxu0 0
        %1256 = vmatprep.subr.bf16.mxu0 0
        %1257 = vmatpush2.bf16.msra.mxu0 0
        %1258 = vmatprep.subr.bf16.mxu0 0
        %1259 = vmatpush2.bf16.msra.mxu0 0
        %1260 = vmatprep.subr.bf16.mxu0 0
        %1261 = vmatpush2.bf16.msra.mxu0 0
        %1262 = vmatprep.subr.bf16.mxu0 0
        %1263 = vmatpush2.bf16.msra.mxu0 0
        %1264 = vmatprep.subr.bf16.mxu0 0
        %1265 = vmatpush2.bf16.msra.mxu0 0
        %1266 = vmatprep.subr.bf16.mxu0 0
        %1267 = vmatpush2.bf16.msra.mxu0 0
        %1268 = vmatprep.subr.bf16.mxu0 0
        %1269 = vmatpush2.bf16.msra.mxu0 0
        %1270 = vmatprep.mubr.bf16.mxu0 0
        %1271 = vmatmul.mubr.bf16.gmra.mxu0 %v1202
        %v1272 = vpop.f32.mrf.mxu0
        %v1273 = vadd.f32 0.0, %v1272
        %v1274 = vpop.f32.mrf.mxu0
        %v1275 = vpop.f32.mrf.mxu0
        %v1276 = vadd.f32 0.0, %v1275
        %v1277 = vpop.f32.mrf.mxu0
        %1278 = vmatprep.mubr.bf16.mxu0 0
        %1279 = vmatmul.mubr.bf16.gmra.mxu0 %v1204
        %v1280 = vpop.f32.mrf.mxu0
        %v1281 = vadd.f32 0.0, %v1280
        %v1282 = vpop.f32.mrf.mxu0
        %v1283 = vpop.f32.mrf.mxu0
        %v1284 = vadd.f32 0.0, %v1283
        %v1285 = vpop.f32.mrf.mxu0
        %1286 = vmatprep.mubr.bf16.mxu0 0
        %1287 = vmatmul.mubr.bf16.gmra.mxu0 %v1206
        %v1288 = vpop.f32.mrf.mxu0
        %v1289 = vadd.f32 0.0, %v1288
        %v1290 = vpop.f32.mrf.mxu0
        %v1291 = vpop.f32.mrf.mxu0
        %v1292 = vadd.f32 0.0, %v1291
        %v1293 = vpop.f32.mrf.mxu0
        %1294 = vmatprep.mubr.bf16.mxu0 0
        %1295 = vmatmul.mubr.bf16.gmra.mxu0 %v1208
        %v1296 = vpop.f32.mrf.mxu0
        %v1297 = vadd.f32 0.0, %v1296
        %v1298 = vpop.f32.mrf.mxu0
        %v1299 = vpop.f32.mrf.mxu0
        %v1300 = vadd.f32 0.0, %v1299
        %v1301 = vpop.f32.mrf.mxu0
        %1302 = vmatprep.mubr.bf16.mxu0 0
        %1303 = vmatmul.mubr.bf16.gmra.mxu0 %v1210
        %v1304 = vpop.f32.mrf.mxu0
        %v1305 = vadd.f32 0.0, %v1304
        %v1306 = vpop.f32.mrf.mxu0
        %v1307 = vpop.f32.mrf.mxu0
        %v1308 = vadd.f32 0.0, %v1307
        %v1309 = vpop.f32.mrf.mxu0
        %1310 = vmatprep.mubr.bf16.mxu0 0
        %1311 = vmatmul.mubr.bf16.gmra.mxu0 %v1212
        %v1312 = vpop.f32.mrf.mxu0
        %v1313 = vadd.f32 0.0, %v1312
        %v1314 = vpop.f32.mrf.mxu0
        %v1315 = vpop.f32.mrf.mxu0
        %v1316 = vadd.f32 0.0, %v1315
        %v1317 = vpop.f32.mrf.mxu0
        %1318 = vmatprep.mubr.bf16.mxu0 0
        %1319 = vmatmul.mubr.bf16.gmra.mxu0 %v1214
        %v1320 = vpop.f32.mrf.mxu0
        %v1321 = vadd.f32 0.0, %v1320
        %v1322 = vpop.f32.mrf.mxu0
        %v1323 = vpop.f32.mrf.mxu0
        %v1324 = vadd.f32 0.0, %v1323
        %v1325 = vpop.f32.mrf.mxu0
        %1326 = vmatprep.mubr.bf16.mxu0 0
        %1327 = vmatmul.mubr.bf16.gmra.mxu0 %v1216
        %v1328 = vpop.f32.mrf.mxu0
        %v1329 = vadd.f32 0.0, %v1328
        %v1330 = vpop.f32.mrf.mxu0
        %v1331 = vpop.f32.mrf.mxu0
        %v1332 = vadd.f32 0.0, %v1331
        %v1333 = vpop.f32.mrf.mxu0
        %1334 = vmatprep.mubr.bf16.mxu0 0
        %1335 = vmatmul.mubr.bf16.gmra.mxu0 %v1218
        %v1336 = vpop.f32.mrf.mxu0
        %v1337 = vadd.f32 0.0, %v1336
        %v1338 = vpop.f32.mrf.mxu0
        %v1339 = vpop.f32.mrf.mxu0
        %v1340 = vadd.f32 0.0, %v1339
        %v1341 = vpop.f32.mrf.mxu0
        %1342 = vmatprep.mubr.bf16.mxu0 0
        %1343 = vmatmul.mubr.bf16.gmra.mxu0 %v1220
        %v1344 = vpop.f32.mrf.mxu0
        %v1345 = vadd.f32 0.0, %v1344
        %v1346 = vpop.f32.mrf.mxu0
        %v1347 = vpop.f32.mrf.mxu0
        %v1348 = vadd.f32 0.0, %v1347
        %v1349 = vpop.f32.mrf.mxu0
        %1350 = vmatprep.mubr.bf16.mxu0 0
        %1351 = vmatmul.mubr.bf16.gmra.mxu0 %v1222
        %v1352 = vpop.f32.mrf.mxu0
        %v1353 = vadd.f32 0.0, %v1352
        %v1354 = vpop.f32.mrf.mxu0
        %v1355 = vpop.f32.mrf.mxu0
        %v1356 = vadd.f32 0.0, %v1355
        %v1357 = vpop.f32.mrf.mxu0
        %1358 = vmatprep.mubr.bf16.mxu0 0
        %1359 = vmatmul.mubr.bf16.gmra.mxu0 %v1224
        %v1360 = vpop.f32.mrf.mxu0
        %v1361 = vadd.f32 0.0, %v1360
        %v1362 = vpop.f32.mrf.mxu0
        %v1363 = vpop.f32.mrf.mxu0
        %v1364 = vadd.f32 0.0, %v1363
        %v1365 = vpop.f32.mrf.mxu0
        %1366 = vmatprep.mubr.bf16.mxu0 0
        %1367 = vmatmul.mubr.bf16.gmra.mxu0 %v1226
        %v1368 = vpop.f32.mrf.mxu0
        %v1369 = vadd.f32 0.0, %v1368
        %v1370 = vpop.f32.mrf.mxu0
        %v1371 = vpop.f32.mrf.mxu0
        %v1372 = vadd.f32 0.0, %v1371
        %v1373 = vpop.f32.mrf.mxu0
        %1374 = vmatprep.mubr.bf16.mxu0 0
        %1375 = vmatmul.mubr.bf16.gmra.mxu0 %v1228
        %v1376 = vpop.f32.mrf.mxu0
        %v1377 = vadd.f32 0.0, %v1376
        %v1378 = vpop.f32.mrf.mxu0
        %v1379 = vpop.f32.mrf.mxu0
        %v1380 = vadd.f32 0.0, %v1379
        %v1381 = vpop.f32.mrf.mxu0
        %1382 = vmatprep.mubr.bf16.mxu0 0
        %1383 = vmatmul.mubr.bf16.gmra.mxu0 %v1230
        %v1384 = vpop.f32.mrf.mxu0
        %v1385 = vadd.f32 0.0, %v1384
        %v1386 = vpop.f32.mrf.mxu0
        %v1387 = vpop.f32.mrf.mxu0
        %v1388 = vadd.f32 0.0, %v1387
        %v1389 = vpop.f32.mrf.mxu0
        %1390 = vmatprep.mubr.bf16.mxu0 0
        %1391 = vmatmul.mubr.bf16.gmra.mxu0 %v1232
        %v1392 = vpop.f32.mrf.mxu0
        %v1393 = vadd.f32 0.0, %v1392
        %v1394 = vpop.f32.mrf.mxu0
        %v1395 = vpop.f32.mrf.mxu0
        %v1396 = vadd.f32 0.0, %v1395
        %v1397 = vpop.f32.mrf.mxu0
        %1398 = vdwg.mxu0
        %1399 = vst [vmem:[%s136] sm:$0xff] %v1273
        %1400 = vst [vmem:[%s136 + $0x8] sm:$0xff] %v1276
        %1401 = vst [vmem:[%s136 + $0x10] sm:$0xff] %v1281
        %1402 = vst [vmem:[%s136 + $0x18] sm:$0xff] %v1284
        %1403 = vst [vmem:[%s136 + $0x20] sm:$0xff] %v1289
        %1404 = vst [vmem:[%s136 + $0x28] sm:$0xff] %v1292
        %1405 = vst [vmem:[%s136 + $0x30] sm:$0xff] %v1297
        %1406 = vst [vmem:[%s136 + $0x38] sm:$0xff] %v1300
        %1407 = vst [vmem:[%s136 + $0x40] sm:$0xff] %v1305
        %1408 = vst [vmem:[%s136 + $0x48] sm:$0xff] %v1308
        %1409 = vst [vmem:[%s136 + $0x50] sm:$0xff] %v1313
        %1410 = vst [vmem:[%s136 + $0x58] sm:$0xff] %v1316
        %1411 = vst [vmem:[%s136 + $0x60] sm:$0xff] %v1321
        %1412 = vst [vmem:[%s136 + $0x68] sm:$0xff] %v1324
        %1413 = vst [vmem:[%s136 + $0x70] sm:$0xff] %v1329
        %1414 = vst [vmem:[%s136 + $0x78] sm:$0xff] %v1332
        %1415 = vst [vmem:[%s136 + $0x80] sm:$0xff] %v1337
        %1416 = vst [vmem:[%s136 + $0x88] sm:$0xff] %v1340
        %1417 = vst [vmem:[%s136 + $0x90] sm:$0xff] %v1345
        %1418 = vst [vmem:[%s136 + $0x98] sm:$0xff] %v1348
        %1419 = vst [vmem:[%s136 + $0xa0] sm:$0xff] %v1353
        %1420 = vst [vmem:[%s136 + $0xa8] sm:$0xff] %v1356
        %1421 = vst [vmem:[%s136 + $0xb0] sm:$0xff] %v1361
        %1422 = vst [vmem:[%s136 + $0xb8] sm:$0xff] %v1364
        %1423 = vst [vmem:[%s136 + $0xc0] sm:$0xff] %v1369
        %1424 = vst [vmem:[%s136 + $0xc8] sm:$0xff] %v1372
        %1425 = vst [vmem:[%s136 + $0xd0] sm:$0xff] %v1377
        %1426 = vst [vmem:[%s136 + $0xd8] sm:$0xff] %v1380
        %1427 = vst [vmem:[%s136 + $0xe0] sm:$0xff] %v1385
        %1428 = vst [vmem:[%s136 + $0xe8] sm:$0xff] %v1388
        %1429 = vst [vmem:[%s136 + $0xf0] sm:$0xff] %v1393
        %1430 = vst [vmem:[%s136 + $0xf8] sm:$0xff] %v1396
        %s1431 = sand.u32 %s71, 1
        %s1432 = scalar_lea.sflag [#allocation4], %s1431
        %s1433 = sand.u32 %s71, 1
        %s1434 = smul.addr %s1433, 256
        %s1435 = scalar_lea.vmem [#allocation3], %s1434
        // Predicated region
        $region29: #{tpu_custom_call.1} parent=27 // pred_check
          %p1436 = pneg %p81
        $region30: #{tpu_custom_call.1} parent=27 // pred_check_branch
          %1438 = sbr.rel (%p1436) target = $region32
        $region31: #{tpu_custom_call.1} parent=27 // pred_region
          %s1440 = ssub.s32 4096, 4096
          %1441 = vsyncadd %s1432, %s1440
          %s1442 = smul.addr %s16, 32
          %s1443 = smul.addr %s1442, 128
          %s1444 = scalar_lea.hbm %s2, %s1443
          %s1445 = sshll.u32 %s1435, 4
          %s1446 = int_to_ptr.vmem [resolvable:$true] %s1445
          %1451 = dma.vmem_to_hbm [thread:$0]  %s1446, 4096, %s1444, %s1432, 128, 128, 8
        $region32: #{tpu_custom_call.1} parent=27 // pred_fallthru
          _
      $region28: #{tpu_custom_call.1} parent=5 // pred_fallthru
        _
      %p1452 = scmp.le.s32.totalorder 2, %s11
      // Predicated region
      $region33: #{tpu_custom_call.1} parent=5 // pred_check
        %p1453 = pneg %p1452
      $region34: #{tpu_custom_call.1} parent=5 // pred_check_branch
        %1455 = sbr.rel (%p1453) target = $region36
      $region35: #{tpu_custom_call.1} parent=5 // pred_region
        %s1456 = ssub.s32 %s11, 2
        // Predicated region
        $region37: #{tpu_custom_call.1} parent=35 // pred_check
          %p1457 = pneg %p87
        $region38: #{tpu_custom_call.1} parent=35 // pred_check_branch
          %1459 = sbr.rel (%p1457) target = $region40
        $region39: #{tpu_custom_call.1} parent=35 // pred_region
          %s1460 = sand.u32 %s72, 1
          %s1461 = scalar_lea.sflag [#allocation4], %s1460
          %s1462 = sand.u32 %s72, 1
          %s1463 = smul.addr %s1462, 256
          %s1464 = scalar_lea.vmem [#allocation3], %s1463
          %1465 = dma.done %s1461, 4096
        $region40: #{tpu_custom_call.1} parent=35 // pred_fallthru
          _
      $region36: #{tpu_custom_call.1} parent=5 // pred_fallthru
        _
    $region6: #{tpu_custom_call.1} parent=1 // loop_footer
      %s15 = sadd.s32 1, %s11
    $region7: #{tpu_custom_call.1} parent=1 // loop_footer_branch
      %10 = sbr.rel target = $region3
    $region8: #{tpu_custom_call.1} parent=1 // loop_exit
      _
    %1466 = vsyncpa [#allocation4], 1
    %s1467 = scalar_lea.sflag [#allocation4], 1
    %1468 = vsyncpa %s1467, 1

</llo_original>
